<compile_context>
chip_gen: v5e
topology: v5e:2x2
jax: 0.10.0
libtpu: 0.0.40
codegen_flags: <defaults>
</compile_context>

<pallas_src>
import jax
import jax.numpy as jnp
from jax.experimental import pallas as pl
from jax.experimental.pallas import tpu as pltpu


# ---------------------------------------------------------------------------
# pltpu.roll sign convention probe (resolved once, baked in at trace time).
# ---------------------------------------------------------------------------
_ROLL_SIGN = None


def _pltpu_roll_sign():
    """Returns +1 if pltpu.roll follows jnp.roll's sign convention, else -1."""
    global _ROLL_SIGN
    if _ROLL_SIGN is None:
        def probe(x_ref, o_ref):
            o_ref[...] = pltpu.roll(x_ref[...], 1, 1)

        x = jnp.arange(8 * 128, dtype=jnp.float32).reshape(8, 128)
        out = pl.pallas_call(
            probe, out_shape=jax.ShapeDtypeStruct((8, 128), jnp.float32))(x)
        _ROLL_SIGN = 1 if bool(jnp.allclose(out, jnp.roll(x, 1, axis=1))) else -1
    return _ROLL_SIGN


# ---------------------------------------------------------------------------
# Kernel
# ---------------------------------------------------------------------------
def _make_resblock_kernel(N, C, H, W, C8, M, L, roll_sign):
    Hp, Wp = H + 2, W + 2
    inv_P = 1.0 / float(N * H * W)

    # Static lane shifts for the 9 taps of a 3x3 conv on the flattened padded
    # pixel axis.  pltpu.roll wraps around, but for every *interior* output
    # lane q the source lane q + s is in-bounds (thanks to the margin M), so
    # wrapped values only land on halo/margin lanes that are never used.
    tap_shifts = [(dy - 1) * Wp + (dx - 1) for dy in range(3) for dx in range(3)]

    def kernel(x_ref, mask_ref, w1_ref, g1_ref, be1_ref, a_ref,
               w2_ref, g2_ref, be2_ref, o_ref):
        x = x_ref[...]          # (C8, L)  f32, pixels on lanes (lane-dense)
        mask = mask_ref[...]    # (1, L)   1.0 at true image pixels, else 0.0

        def im2col(y):
            taps = []
            for s in tap_shifts:
                if s == 0:
                    taps.append(y)
                else:
                    # want taps[t][c, q] == y[c, q + s]
                    taps.append(pltpu.roll(y, (-roll_sign * s) % L, 1))
            return jnp.concatenate(taps, axis=0)               # (9*C8, L)

        def conv3x3(y, w_ref):
            # One fused im2col matmul per conv (K = 9*C8), f32 accumulate.
            return jnp.dot(w_ref[...], im2col(y),
                           preferred_element_type=jnp.float32)  # (C8, L)

        def batchnorm(y, g_ref, be_ref, eps=1e-5):
            # One-pass batch stats over interior pixels only.
            ym = y * mask
            s1 = jnp.sum(ym, axis=1, keepdims=True)             # (C8, 1)
            s2 = jnp.sum(ym * y, axis=1, keepdims=True)         # (C8, 1)
            mean = s1 * inv_P
            var = s2 * inv_P - mean * mean
            return (y - mean) * jax.lax.rsqrt(var + eps) * g_ref[...] + be_ref[...]

        # conv1 -> BN1 -> PReLU  (conv bias omitted: cancelled by BN mean)
        y = conv3x3(x, w1_ref)
        y = batchnorm(y, g1_ref, be1_ref)
        a = a_ref[0, 0]
        y = jnp.where(y >= 0.0, y, a * y)
        # Zero the spatial halo / margins so conv2 sees proper zero padding.
        y = y * mask

        # conv2 -> BN2 -> residual add
        z = conv3x3(y, w2_ref)
        z = batchnorm(z, g2_ref, be2_ref)

        o_ref[...] = x + z      # lane-dense full-tile store

    return kernel


# ---------------------------------------------------------------------------
# Parameter / activation packing helpers (wrapper side, plain XLA)
# ---------------------------------------------------------------------------
def _pack_conv_weight(w_oihw, C8):
    # (Cout, Cin, 3, 3) -> (C8, 9*C8); columns [t*C8 + c_in] hold W[:, c_in, dy, dx]
    C = w_oihw.shape[0]
    w = jnp.transpose(w_oihw.astype(jnp.float32), (2, 3, 0, 1)).reshape(9, C, C)
    w = jnp.pad(w, ((0, 0), (0, C8 - C), (0, C8 - C)))          # (9, C8, C8)
    return jnp.transpose(w, (1, 0, 2)).reshape(C8, 9 * C8)


def _pad_vec(v, C8):
    C = v.shape[0]
    return jnp.pad(v.astype(jnp.float32), (0, C8 - C)).reshape(C8, 1)


def residual_block_pallas(x_nchw, params):
    (w1, b1, g1, be1, a, w2, b2, g2, be2) = params
    del b1, b2  # conv biases are cancelled exactly by BN mean subtraction
    N, C, H, W = x_nchw.shape
    Hp, Wp = H + 2, W + 2
    Pp = N * Hp * Wp
    M = Wp + 1                                  # margin so every tap shift stays in-bounds
    C8 = ((C + 7) // 8) * 8                     # sublane-pad channels
    L = ((Pp + 2 * M + 127) // 128) * 128       # lane-pad flattened padded pixels

    # Activation: channels on sublanes, zero-padded (spatially) flattened
    # pixels on lanes, zero margins at both ends.
    xp = jnp.pad(x_nchw.astype(jnp.float32),
                 ((0, 0), (0, C8 - C), (1, 1), (1, 1)))          # (N, C8, Hp, Wp)
    x_full = jnp.pad(jnp.transpose(xp, (1, 0, 2, 3)).reshape(C8, Pp),
                     ((0, 0), (M, L - Pp - M)))                  # (C8, L)

    # Interior mask: 1.0 at true image pixels, 0.0 at halo / margin lanes.
    m2d = jnp.zeros((Hp, Wp), jnp.float32).at[1:H + 1, 1:W + 1].set(1.0)
    mask = jnp.pad(jnp.tile(m2d.reshape(-1), (N,)),
                   (M, L - Pp - M)).reshape(1, L)

    kernel = _make_resblock_kernel(N, C, H, W, C8, M, L, _pltpu_roll_sign())
    vmem = pl.BlockSpec(memory_space=pltpu.MemorySpace.VMEM)
    smem = pl.BlockSpec(memory_space=pltpu.MemorySpace.SMEM)

    out = pl.pallas_call(
        kernel,
        out_shape=jax.ShapeDtypeStruct((C8, L), jnp.float32),
        in_specs=[vmem, vmem,               # x, interior mask
                  vmem, vmem, vmem,         # conv1 weights, bn1 gamma/beta
                  smem,                     # prelu slope (scalar)
                  vmem, vmem, vmem],        # conv2 weights, bn2 gamma/beta
        out_specs=vmem,
        compiler_params=pltpu.CompilerParams(
            vmem_limit_bytes=32 * 1024 * 1024),
        # TODO(synk): for production N*H*W, tile the pixel axis with a real
        # grid (two-phase BN statistics across an "arbitrary" axis) and cast
        # the matmul inputs to bf16 on v6e/v7x.
    )(x_full, mask,
      _pack_conv_weight(w1, C8), _pad_vec(g1, C8), _pad_vec(be1, C8),
      jnp.asarray(a, jnp.float32).reshape(1, 1),
      _pack_conv_weight(w2, C8), _pad_vec(g2, C8), _pad_vec(be2, C8))

    y = out[:C, M:M + Pp].reshape(C, N, Hp, Wp)[:, :, 1:H + 1, 1:W + 1]
    return jnp.transpose(y, (1, 0, 2, 3))


# ---------------------------------------------------------------------------
# Pure-JAX reference matching the PyTorch forward (training-mode BN)
# ---------------------------------------------------------------------------
def residual_block_reference(x_nchw, params):
    (w1, b1, g1, be1, a, w2, b2, g2, be2) = params

    def conv(x, w, b):
        y = jax.lax.conv_general_dilated(
            x, w, window_strides=(1, 1), padding="SAME",
            dimension_numbers=("NCHW", "OIHW", "NCHW"))
        return y + b[None, :, None, None]

    def bn(x, g, be, eps=1e-5):
        mean = jnp.mean(x, axis=(0, 2, 3), keepdims=True)
        var = jnp.mean((x - mean) ** 2, axis=(0, 2, 3), keepdims=True)
        return (x - mean) * jax.lax.rsqrt(var + eps) * g[None, :, None, None] \
            + be[None, :, None, None]

    y = conv(x_nchw, w1, b1)
    y = bn(y, g1, be1)
    y = jnp.where(y >= 0.0, y, a * y)
    y = conv(y, w2, b2)
    y = bn(y, g2, be2)
    return x_nchw + y


if __name__ == "__main__":
    N, C, H, W = 2, 4, 16, 16
    key = jax.random.PRNGKey(0)
    kx, k1, k2, k3, k4 = jax.random.split(key, 5)

    x = jax.random.normal(kx, (N, C, H, W), jnp.float32)

    # Deterministic parameter init (shapes per nn.Module.__init__):
    w1 = 0.2 * jax.random.normal(k1, (C, C, 3, 3), jnp.float32)   # Conv2d #1
    b1 = 0.1 * jax.random.normal(k2, (C,), jnp.float32)
    g1 = jnp.ones((C,), jnp.float32)                              # BatchNorm2d #1
    be1 = jnp.zeros((C,), jnp.float32)
    a = jnp.float32(0.25)                                         # PReLU (default)
    w2 = 0.2 * jax.random.normal(k3, (C, C, 3, 3), jnp.float32)   # Conv2d #2
    b2 = 0.1 * jax.random.normal(k4, (C,), jnp.float32)
    g2 = jnp.ones((C,), jnp.float32)                              # BatchNorm2d #2
    be2 = jnp.zeros((C,), jnp.float32)

    params = (w1, b1, g1, be1, a, w2, b2, g2, be2)

    out = jax.block_until_ready(residual_block_pallas(x, params))
    ref = jax.block_until_ready(residual_block_reference(x, params))

    assert out.shape == x.shape and out.dtype == x.dtype
    assert jnp.allclose(out, ref, atol=2e-3, rtol=2e-3), \
        f"max abs err {jnp.max(jnp.abs(out - ref))}"

    print("KERNEL_OK")
</pallas_src>

<mosaic_0001>
module attributes {stable_mosaic.version = 11 : i64} {
  func.func @probe(%arg0: memref<8x128xf32, #tpu.memory_space<vmem>>, %arg1: memref<8x128xf32, #tpu.memory_space<vmem>>) attributes {dimension_semantics = [], scalar_prefetch = 0 : i64, scratch_operands = 0 : i64, tpu.core_type = #tpu.core_type<tc>} {
    %c0 = arith.constant 0 : index
    %c0_0 = arith.constant 0 : index
    %0 = vector.load %arg0[%c0, %c0_0] : memref<8x128xf32, #tpu.memory_space<vmem>>, vector<8x128xf32>
    %c1_i32 = arith.constant 1 : i32
    %1 = tpu.dynamic_rotate %0 by %c1_i32 dim 1 : vector<8x128xf32>, i32 -> vector<8x128xf32>
    %c0_1 = arith.constant 0 : index
    %c0_2 = arith.constant 0 : index
    %2 = vector.load %arg1[%c0_1, %c0_2] : memref<8x128xf32, #tpu.memory_space<vmem>>, vector<8x128xf32>
    tpu.vector_store %arg1[%c0_1, %c0_2], %1 {strides = array<i32>} : memref<8x128xf32, #tpu.memory_space<vmem>>, vector<8x128xf32>,
    return
  }
}

</mosaic_0001>

<llo_original>
// kernel: tpu_custom_call.1
$region0: #{tpu_custom_call.1}
  #allocation0 [shape = 'u32[]', space=smem, size = 0x4, offset = 0x4, fixed_abs, tag = 'smem constant byte address 0x4 - core index']
  #allocation1 [shape = 'u32[72,128]{1,0:T(1,128)}', space=vmem, size = 0x9000, scoped, tag = 'internal scratch']
  %s0 = inlined_call_operand.hbm [shape: f32[8,128], index: 0, kind: input, shape index: {}]
  %s1 = inlined_call_operand.hbm [shape: f32[8,128], index: 1, kind: output, shape index: {}]
  %s2 = sld [smem:[#allocation0]]
  $region18: #{tpu_custom_call.1} parent=0
    _
  %s4 = ssub.s32 1, %s2
  %s5 = scalar_select 0, %s4, %s2
  $region1: #{tpu_custom_call.1} parent=0
    #allocation2 [shape = 'u8[4096]{0}', space=vmem, size = 0x1000, scoped, tag = 'input window, operand 0, single buffered']
    #allocation3 [shape = 's32[1]{0}', space=sflag, size = 0x4, scoped, tag = 'scoped memory for tpu_custom_call.1']
    #allocation4 [shape = 's32[1]{0}', space=sflag, size = 0x4, scoped, tag = 'scoped memory for tpu_custom_call.1']
    #allocation5 [shape = 'u8[4096]{0}', space=vmem, size = 0x1000, scoped, tag = 'output window, operand 0, single buffered']
    %6 = vsyncpa [#allocation3], 0
    %7 = vsyncpa [#allocation4], 0
    // Predicated region
    $region2: #{tpu_custom_call.1} parent=1 // pred_check
      _
    $region3: #{tpu_custom_call.1} parent=1 // pred_check_branch
      %9 = sbr.rel (0) target = $region5
    $region4: #{tpu_custom_call.1} parent=1 // pred_region
      %11 = vsyncadd [#allocation3], 0
      %s13 = sshll.u32 %s0, 4
      %s14 = int_to_ptr.hbm [resolvable:$true] %s13
      %s15 = sshll.u32 [#allocation2], 4
      %s16 = int_to_ptr.vmem [resolvable:$true] %s15
      %18 = dma.hbm_to_vmem [thread:$0]  %s14, 128, %s16, [#allocation3]
    $region5: #{tpu_custom_call.1} parent=1 // pred_fallthru
      _
    // Predicated region
    $region6: #{tpu_custom_call.1} parent=1 // pred_check
      _
    $region7: #{tpu_custom_call.1} parent=1 // pred_check_branch
      %20 = sbr.rel (0) target = $region9
    $region8: #{tpu_custom_call.1} parent=1 // pred_region
      %22 = dma.done [#allocation3], 128
    $region9: #{tpu_custom_call.1} parent=1 // pred_fallthru
      _
    %v23 = vld [vmem:[#allocation2] sm:$0xff]
    %24 = vrot.lane.b32.xlu0 %v23, 1
    %v25 = vpop.permute.xlu0 %24
    %26 = vst [vmem:[#allocation5] sm:$0xff] %v25
    // Predicated region
    $region10: #{tpu_custom_call.1} parent=1 // pred_check
      _
    $region11: #{tpu_custom_call.1} parent=1 // pred_check_branch
      %28 = sbr.rel (0) target = $region13
    $region12: #{tpu_custom_call.1} parent=1 // pred_region
      %30 = vsyncadd [#allocation4], 0
      %s32 = sshll.u32 [#allocation5], 4
      %s33 = int_to_ptr.vmem [resolvable:$true] %s32
      %s34 = sshll.u32 %s1, 4
      %s35 = int_to_ptr.hbm [resolvable:$true] %s34
      %37 = dma.vmem_to_hbm [thread:$0]  %s33, 128, %s35, [#allocation4]
    $region13: #{tpu_custom_call.1} parent=1 // pred_fallthru
      _
    // Predicated region
    $region14: #{tpu_custom_call.1} parent=1 // pred_check
      _
    $region15: #{tpu_custom_call.1} parent=1 // pred_check_branch
      %39 = sbr.rel (0) target = $region17
    $region16: #{tpu_custom_call.1} parent=1 // pred_region
      %41 = dma.done [#allocation4], 128
    $region17: #{tpu_custom_call.1} parent=1 // pred_fallthru
      _
    %42 = vsyncpa [#allocation3], 1
    %43 = vsyncpa [#allocation4], 1

</llo_original>
